<compile_context>
chip_gen: v7x
topology: tpu7x:2x2x1
jax: 0.10.0
libtpu: 0.0.40
codegen_flags: <defaults>
</compile_context>

<pallas_src>
import functools

import jax
import jax.numpy as jnp
from jax.experimental import pallas as pl
from jax.experimental.pallas import tpu as pltpu
from jax.scipy.linalg import block_diag as _jsp_block_diag


# ----------------------------- kernel ---------------------------------------


def _make_kernel(n_layers: int, n_flat: int, compute_dtype):
    """n_layers = len(hidden) + 1 fused (shared|agent) layers; n_flat = A*n_actions."""

    def kernel(*refs):
        obs_ref = refs[0]                                     # (TB, A*D)
        layers = [(refs[1 + 2 * i], refs[2 + 2 * i]) for i in range(n_layers)]
        base = 1 + 2 * n_layers
        wc1_ref, bc1_ref, wc2_ref, bc2_ref = refs[base:base + 4]
        out_ref = refs[base + 4]                              # (TB, OUT_W) slab

        h = obs_ref[...]                                      # compute dtype
        for i, (w_ref, b_ref) in enumerate(layers):
            # One fused block-diagonal matmul per layer for both branches & all
            # agents.  MXU matmul, f32 accumulation; bias add / ReLU in f32.
            acc = jnp.dot(h, w_ref[...],
                          preferred_element_type=jnp.float32) + b_ref[...]
            if i < n_layers - 1:
                h = jnp.maximum(acc, 0.0).astype(compute_dtype)
            else:
                h = acc                                       # (TB, 2*A*n_act) f32

        hs = h[:, :n_flat]                                    # shared branch
        ha = h[:, n_flat:]                                    # agent branch == dev
        logits = hs + ha                                      # f32

        # critic: Linear(A*n_act, 128) -> ReLU -> Linear(128, 1)
        hc = jnp.maximum(
            jnp.dot(logits.astype(compute_dtype), wc1_ref[...],
                    preferred_element_type=jnp.float32) + bc1_ref[...], 0.0)
        # 128 -> 1 as VPU multiply + lane reduction (avoid an N=1 MXU matmul).
        w2 = wc2_ref[...].astype(jnp.float32)                 # (1, 128)
        value = jnp.sum(hc * w2, axis=-1, keepdims=True) + bc2_ref[...]  # (TB, 1)

        # Assemble one lane-dense 128-wide tile -> unmasked full-width store.
        tb = logits.shape[0]
        vwidth = out_ref.shape[-1] - 2 * n_flat
        out_ref[...] = jnp.concatenate(
            [logits, ha, jnp.broadcast_to(value, (tb, vwidth))], axis=-1)

    return kernel


# ----------------------------- wrapper ---------------------------------------


def _round_up(x: int, m: int) -> int:
    return ((x + m - 1) // m) * m


def _pick_batch_tile(batch: int, block_b: int, multiple: int = 16) -> int:
    tb = min(block_b, _round_up(batch, multiple))
    # Keep >= 2 grid iterations when the batch is big enough, so the "parallel"
    # batch axis can shard across both v7x TensorCores.
    if batch >= 2 * multiple:
        tb = min(tb, _round_up(-(-batch // 2), multiple))
    return max(tb, multiple)


def prepare_params(params, n_agents: int, *, compute_dtype=jnp.bfloat16):
    """One-time (outside the hot loop) construction of fused kernel weights."""
    A = n_agents
    shared, agent, critic = params["shared"], params["agent"], params["critic"]
    cd = compute_dtype

    fused = []
    for i, ((ws, bs), (wa, ba)) in enumerate(zip(shared, agent)):
        bd_s = _jsp_block_diag(*([ws] * A))                       # (A*din, A*dout)
        bd_a = _jsp_block_diag(*[wa[a] for a in range(A)])        # (A*din, A*dout)
        if i == 0:
            # first layer consumes the obs slab once: columns = [shared | agent]
            w = jnp.concatenate([bd_s, bd_a], axis=1)             # (A*din, 2*A*dout)
        else:
            # hidden state carries [h_shared | h_agent]
            w = _jsp_block_diag(bd_s, bd_a)                       # (2*A*din, 2*A*dout)
        b = jnp.concatenate([jnp.tile(bs, (1, A)),
                             ba.reshape(1, A * ba.shape[-1])], axis=1)
        fused.append((w.astype(cd), b.astype(jnp.float32)))

    wc1, bc1, wc2, bc2 = critic
    return {
        "layers": fused,
        "wc1": wc1.astype(cd),                    # (A*n_act, 128)
        "bc1": bc1.astype(jnp.float32),           # (1, 128)
        "wc2_row": wc2.T.astype(cd),              # (1, 128)
        "bc2": bc2.astype(jnp.float32),           # (1, 1)
    }


def actor_critic_forward(obs, kparams, *, block_b=512):
    """obs: (B, n_agents, obs_dim) float32. Returns (logits, value, dev)."""
    B, A, D = obs.shape
    layers = kparams["layers"]
    n_layers = len(layers)
    cd = layers[0][0].dtype
    n_flat = layers[-1][0].shape[-1] // 2          # A * n_actions
    n_actions = n_flat // A

    out_w = max(128, _round_up(2 * n_flat + 1, 128))

    # batch tiling: pad B up to a multiple of the tile (no giant-block fallback)
    tb = _pick_batch_tile(B, block_b)
    b_pad = _round_up(B, tb)
    grid = (b_pad // tb,)

    obs_flat = obs.reshape(B, A * D).astype(cd)    # lane-dense obs slab
    if b_pad != B:
        obs_flat = jnp.pad(obs_flat, ((0, b_pad - B), (0, 0)))

    resident = []
    for w, b in layers:
        resident += [w, b]
    resident += [kparams["wc1"], kparams["bc1"], kparams["wc2_row"], kparams["bc2"]]

    def const_spec(shape):
        return pl.BlockSpec(shape, lambda i: (0, 0))   # constant index -> fetched once

    out = pl.pallas_call(
        _make_kernel(n_layers, n_flat, cd),
        grid=grid,
        out_shape=jax.ShapeDtypeStruct((b_pad, out_w), jnp.float32),
        in_specs=[pl.BlockSpec((tb, A * D), lambda i: (i, 0))]
                 + [const_spec(x.shape) for x in resident],
        out_specs=pl.BlockSpec((tb, out_w), lambda i: (i, 0)),
        compiler_params=pltpu.CompilerParams(
            dimension_semantics=("parallel",),
            vmem_limit_bytes=32 * 1024 * 1024),
    )(obs_flat, *resident)

    logits = out[:B, :n_flat].reshape(B, A, n_actions)
    dev = out[:B, n_flat:2 * n_flat].reshape(B, A, n_actions)
    value = out[:B, 2 * n_flat]
    return logits, value, dev


# ------------- deterministic parameter construction (PyTorch Linear-style init) -------


def _linear_init(key, fan_in, shape):
    bound = 1.0 / jnp.sqrt(jnp.float32(fan_in))
    return jax.random.uniform(key, shape, jnp.float32, -bound, bound)


def build_params(key, obs_dim, n_agents, n_actions, hidden):
    dims = [obs_dim] + list(hidden) + [n_actions]
    keys = jax.random.split(key, 4 * (len(dims) - 1) * 2 + 8)
    k = iter(range(len(keys)))

    shared = []
    for i in range(len(dims) - 1):
        w = _linear_init(keys[next(k)], dims[i], (dims[i], dims[i + 1]))
        b = _linear_init(keys[next(k)], dims[i], (1, dims[i + 1]))
        shared.append((w, b))

    agent = []
    for i in range(len(dims) - 1):
        w = _linear_init(keys[next(k)], dims[i], (n_agents, dims[i], dims[i + 1]))
        b = _linear_init(keys[next(k)], dims[i], (n_agents, 1, dims[i + 1]))
        agent.append((w, b))

    feature_size = n_agents * n_actions
    wc1 = _linear_init(keys[next(k)], feature_size, (feature_size, 128))
    bc1 = _linear_init(keys[next(k)], feature_size, (1, 128))
    wc2 = _linear_init(keys[next(k)], 128, (128, 1))
    bc2 = _linear_init(keys[next(k)], 128, (1, 1))

    return {"shared": shared, "agent": agent, "critic": (wc1, bc1, wc2, bc2)}


def reference_forward(obs, params, compute_dtype=jnp.float32):
    """Pure-JAX reference matching the PyTorch module semantics (with the same
    mixed-precision quantization points as the kernel)."""
    cd = compute_dtype

    def mlp(x, layers):
        h = x.astype(cd)
        n = len(layers)
        for i, (w, b) in enumerate(layers):
            acc = jnp.dot(h, w.astype(cd),
                          preferred_element_type=jnp.float32) + b.astype(jnp.float32)
            h = jnp.maximum(acc, 0.0).astype(cd) if i < n - 1 else acc
        return h

    B, A, _ = obs.shape
    shared_out = jnp.stack(
        [mlp(obs[:, a, :], params["shared"]) for a in range(A)], axis=1)
    dev = jnp.stack(
        [mlp(obs[:, a, :], [(w[a], b[a]) for w, b in params["agent"]])
         for a in range(A)], axis=1)
    logits = shared_out + dev

    wc1, bc1, wc2, bc2 = params["critic"]
    flat = logits.reshape(B, -1)
    hc = jnp.maximum(
        jnp.dot(flat.astype(cd), wc1.astype(cd),
                preferred_element_type=jnp.float32) + bc1.astype(jnp.float32), 0.0)
    value = (jnp.sum(hc * wc2.astype(cd).astype(jnp.float32).T,
                     axis=-1, keepdims=True) + bc2.astype(jnp.float32))
    return logits, jnp.squeeze(value, axis=-1), dev


if __name__ == "__main__":
    obs_dim, n_agents, n_actions = 16, 4, 8
    hidden = [32, 32]

    key = jax.random.PRNGKey(0)
    k_obs, k_params, k_obs2 = jax.random.split(key, 3)
    params = build_params(k_params, obs_dim, n_agents, n_actions, hidden)

    # ---- small f32 check (B=2, padded to one 16-row block) ----
    B = 2
    obs = jax.random.normal(k_obs, (B, n_agents, obs_dim), jnp.float32)
    kparams_f32 = prepare_params(params, n_agents, compute_dtype=jnp.float32)
    fwd = jax.jit(functools.partial(actor_critic_forward, kparams=kparams_f32))
    logits, value, dev = jax.block_until_ready(fwd(obs))

    ref_logits, ref_value, ref_dev = reference_forward(obs, params)
    assert logits.shape == (B, n_agents, n_actions)
    assert value.shape == (B,)
    assert dev.shape == (B, n_agents, n_actions)
    assert jnp.allclose(logits, ref_logits, atol=1e-4, rtol=1e-4)
    assert jnp.allclose(value, ref_value, atol=1e-4, rtol=1e-4)
    assert jnp.allclose(dev, ref_dev, atol=1e-4, rtol=1e-4)

    # ---- larger bf16 check (B=250, padded to 256, batch grid of 2 blocks) ----
    B2 = 250
    obs2 = jax.random.normal(k_obs2, (B2, n_agents, obs_dim), jnp.float32)
    kparams_bf16 = prepare_params(params, n_agents, compute_dtype=jnp.bfloat16)
    fwd_bf16 = jax.jit(functools.partial(actor_critic_forward, kparams=kparams_bf16))
    logits2, value2, dev2 = jax.block_until_ready(fwd_bf16(obs2))

    r_logits2, r_value2, r_dev2 = reference_forward(
        obs2, params, compute_dtype=jnp.bfloat16)
    assert logits2.shape == (B2, n_agents, n_actions)
    assert value2.shape == (B2,)
    assert jnp.allclose(logits2, r_logits2, atol=1e-2, rtol=1e-2)
    assert jnp.allclose(value2, r_value2, atol=1e-2, rtol=1e-2)
    assert jnp.allclose(dev2, r_dev2, atol=1e-2, rtol=1e-2)

    print("KERNEL_OK")
</pallas_src>

<mosaic_0001>
module attributes {stable_mosaic.version = 11 : i64} {
  func.func @kernel(%arg0: i32, %arg1: memref<16x64xf32, #tpu.memory_space<vmem>>, %arg2: memref<64x256xf32, #tpu.memory_space<vmem>>, %arg3: memref<1x256xf32, #tpu.memory_space<vmem>>, %arg4: memref<256x256xf32, #tpu.memory_space<vmem>>, %arg5: memref<1x256xf32, #tpu.memory_space<vmem>>, %arg6: memref<256x64xf32, #tpu.memory_space<vmem>>, %arg7: memref<1x64xf32, #tpu.memory_space<vmem>>, %arg8: memref<32x128xf32, #tpu.memory_space<vmem>>, %arg9: memref<1x128xf32, #tpu.memory_space<vmem>>, %arg10: memref<1x128xf32, #tpu.memory_space<vmem>>, %arg11: memref<1x1xf32, #tpu.memory_space<vmem>>, %arg12: memref<16x128xf32, #tpu.memory_space<vmem>>) attributes {dimension_semantics = [#tpu.dimension_semantics<parallel>], iteration_bounds = array<i64: 1>, scalar_prefetch = 0 : i64, scratch_operands = 0 : i64, tpu.core_type = #tpu.core_type<tc>, window_params = [{transform_indices = @transform_0, window_bounds = array<i64: 16, 64>}, {pipeline_mode = #tpu.pipeline_mode<synchronous>, transform_indices = @transform_1, window_bounds = array<i64: 64, 256>}, {pipeline_mode = #tpu.pipeline_mode<synchronous>, transform_indices = @transform_2, window_bounds = array<i64: 1, 256>}, {pipeline_mode = #tpu.pipeline_mode<synchronous>, transform_indices = @transform_3, window_bounds = array<i64: 256, 256>}, {pipeline_mode = #tpu.pipeline_mode<synchronous>, transform_indices = @transform_4, window_bounds = array<i64: 1, 256>}, {pipeline_mode = #tpu.pipeline_mode<synchronous>, transform_indices = @transform_5, window_bounds = array<i64: 256, 64>}, {pipeline_mode = #tpu.pipeline_mode<synchronous>, transform_indices = @transform_6, window_bounds = array<i64: 1, 64>}, {pipeline_mode = #tpu.pipeline_mode<synchronous>, transform_indices = @transform_7, window_bounds = array<i64: 32, 128>}, {pipeline_mode = #tpu.pipeline_mode<synchronous>, transform_indices = @transform_8, window_bounds = array<i64: 1, 128>}, {pipeline_mode = #tpu.pipeline_mode<synchronous>, transform_indices = @transform_9, window_bounds = array<i64: 1, 128>}, {pipeline_mode = #tpu.pipeline_mode<synchronous>, transform_indices = @transform_10, window_bounds = array<i64: 1, 1>}, {transform_indices = @transform_11, window_bounds = array<i64: 16, 128>}]} {
    %c0 = arith.constant 0 : index
    %c0_0 = arith.constant 0 : index
    %0 = vector.load %arg1[%c0, %c0_0] : memref<16x64xf32, #tpu.memory_space<vmem>>, vector<16x64xf32>
    %c0_1 = arith.constant 0 : index
    %c0_2 = arith.constant 0 : index
    %1 = vector.load %arg2[%c0_1, %c0_2] : memref<64x256xf32, #tpu.memory_space<vmem>>, vector<64x256xf32>
    %cst = arith.constant dense<0.000000e+00> : vector<16x256xf32>
    %2 = tpu.matmul %0, %1, %cst {dimension_numbers = #tpu.dot_dimension_numbers<[1], [0], [0], [1], [0, 0, 1, 1], [], []>} : vector<16x64xf32>, vector<64x256xf32>, vector<16x256xf32> -> vector<16x256xf32>
    %c0_3 = arith.constant 0 : index
    %c0_4 = arith.constant 0 : index
    %3 = vector.load %arg3[%c0_3, %c0_4] : memref<1x256xf32, #tpu.memory_space<vmem>>, vector<1x256xf32>
    %4 = vector.broadcast %3 : vector<1x256xf32> to vector<16x256xf32>
    %5 = arith.addf %2, %4 : vector<16x256xf32>
    %cst_5 = arith.constant 0.000000e+00 : f32
    %6 = vector.broadcast %cst_5 : f32 to vector<16x256xf32>
    %7 = arith.maximumf %5, %6 : vector<16x256xf32>
    %c0_6 = arith.constant 0 : index
    %c0_7 = arith.constant 0 : index
    %8 = vector.load %arg4[%c0_6, %c0_7] : memref<256x256xf32, #tpu.memory_space<vmem>>, vector<256x256xf32>
    %cst_8 = arith.constant dense<0.000000e+00> : vector<16x256xf32>
    %9 = tpu.matmul %7, %8, %cst_8 {dimension_numbers = #tpu.dot_dimension_numbers<[1], [0], [0], [1], [0, 0, 1, 1], [], []>} : vector<16x256xf32>, vector<256x256xf32>, vector<16x256xf32> -> vector<16x256xf32>
    %c0_9 = arith.constant 0 : index
    %c0_10 = arith.constant 0 : index
    %10 = vector.load %arg5[%c0_9, %c0_10] : memref<1x256xf32, #tpu.memory_space<vmem>>, vector<1x256xf32>
    %11 = vector.broadcast %10 : vector<1x256xf32> to vector<16x256xf32>
    %12 = arith.addf %9, %11 : vector<16x256xf32>
    %cst_11 = arith.constant 0.000000e+00 : f32
    %13 = vector.broadcast %cst_11 : f32 to vector<16x256xf32>
    %14 = arith.maximumf %12, %13 : vector<16x256xf32>
    %c0_12 = arith.constant 0 : index
    %c0_13 = arith.constant 0 : index
    %15 = vector.load %arg6[%c0_12, %c0_13] : memref<256x64xf32, #tpu.memory_space<vmem>>, vector<256x64xf32>
    %cst_14 = arith.constant dense<0.000000e+00> : vector<16x64xf32>
    %16 = tpu.matmul %14, %15, %cst_14 {dimension_numbers = #tpu.dot_dimension_numbers<[1], [0], [0], [1], [0, 0, 1, 1], [], []>} : vector<16x256xf32>, vector<256x64xf32>, vector<16x64xf32> -> vector<16x64xf32>
    %c0_15 = arith.constant 0 : index
    %c0_16 = arith.constant 0 : index
    %17 = vector.load %arg7[%c0_15, %c0_16] : memref<1x64xf32, #tpu.memory_space<vmem>>, vector<1x64xf32>
    %18 = vector.broadcast %17 : vector<1x64xf32> to vector<16x64xf32>
    %19 = arith.addf %16, %18 : vector<16x64xf32>
    %20 = vector.extract_strided_slice %19 {offsets = [0, 0], sizes = [16, 32], strides = [1, 1]} : vector<16x64xf32> to vector<16x32xf32>
    %21 = vector.extract_strided_slice %19 {offsets = [0, 32], sizes = [16, 32], strides = [1, 1]} : vector<16x64xf32> to vector<16x32xf32>
    %22 = arith.addf %20, %21 : vector<16x32xf32>
    %c0_17 = arith.constant 0 : index
    %c0_18 = arith.constant 0 : index
    %23 = vector.load %arg8[%c0_17, %c0_18] : memref<32x128xf32, #tpu.memory_space<vmem>>, vector<32x128xf32>
    %cst_19 = arith.constant dense<0.000000e+00> : vector<16x128xf32>
    %24 = tpu.matmul %22, %23, %cst_19 {dimension_numbers = #tpu.dot_dimension_numbers<[1], [0], [0], [1], [0, 0, 1, 1], [], []>} : vector<16x32xf32>, vector<32x128xf32>, vector<16x128xf32> -> vector<16x128xf32>
    %c0_20 = arith.constant 0 : index
    %c0_21 = arith.constant 0 : index
    %25 = vector.load %arg9[%c0_20, %c0_21] : memref<1x128xf32, #tpu.memory_space<vmem>>, vector<1x128xf32>
    %26 = vector.broadcast %25 : vector<1x128xf32> to vector<16x128xf32>
    %27 = arith.addf %24, %26 : vector<16x128xf32>
    %cst_22 = arith.constant 0.000000e+00 : f32
    %28 = vector.broadcast %cst_22 : f32 to vector<16x128xf32>
    %29 = arith.maximumf %27, %28 : vector<16x128xf32>
    %c0_23 = arith.constant 0 : index
    %c0_24 = arith.constant 0 : index
    %30 = vector.load %arg10[%c0_23, %c0_24] : memref<1x128xf32, #tpu.memory_space<vmem>>, vector<1x128xf32>
    %31 = vector.broadcast %30 : vector<1x128xf32> to vector<16x128xf32>
    %32 = arith.mulf %29, %31 : vector<16x128xf32>
    %cst_25 = arith.constant dense<0.000000e+00> : vector<16xf32>
    %33 = vector.multi_reduction <add>, %32, %cst_25 [1] : vector<16x128xf32> to vector<16xf32>
    %34 = vector.shape_cast %33 : vector<16xf32> to vector<16x1xf32>
    %c0_26 = arith.constant 0 : index
    %c0_27 = arith.constant 0 : index
    %35 = vector.load %arg11[%c0_26, %c0_27] : memref<1x1xf32, #tpu.memory_space<vmem>>, vector<1x1xf32>
    %36 = vector.broadcast %35 : vector<1x1xf32> to vector<16x1xf32>
    %37 = arith.addf %34, %36 : vector<16x1xf32>
    %38 = vector.shape_cast %37 : vector<16x1xf32> to vector<16x1xf32>
    %39 = vector.broadcast %38 : vector<16x1xf32> to vector<16x64xf32>
    %40 = tpu.concatenate %22, %21, %39 in 1 : vector<16x32xf32>, vector<16x32xf32>, vector<16x64xf32> -> vector<16x128xf32>
    %c0_28 = arith.constant 0 : index
    %c0_29 = arith.constant 0 : index
    %41 = vector.load %arg12[%c0_28, %c0_29] : memref<16x128xf32, #tpu.memory_space<vmem>>, vector<16x128xf32>
    tpu.vector_store %arg12[%c0_28, %c0_29], %40 {strides = array<i32>} : memref<16x128xf32, #tpu.memory_space<vmem>>, vector<16x128xf32>,
    return
  }
  func.func @transform_0(%arg0: i32) -> (i32, i32) {
    %c0_i32 = arith.constant 0 : i32
    %c0_i32_0 = arith.constant 0 : i32
    return %arg0, %c0_i32 : i32, i32
  }
  func.func @transform_1(%arg0: i32) -> (i32, i32) {
    %c0_i32 = arith.constant 0 : i32
    %c0_i32_0 = arith.constant 0 : i32
    %c0_i32_1 = arith.constant 0 : i32
    return %c0_i32, %c0_i32_0 : i32, i32
  }
  func.func @transform_2(%arg0: i32) -> (i32, i32) {
    %c0_i32 = arith.constant 0 : i32
    %c0_i32_0 = arith.constant 0 : i32
    %c0_i32_1 = arith.constant 0 : i32
    return %c0_i32, %c0_i32_0 : i32, i32
  }
  func.func @transform_3(%arg0: i32) -> (i32, i32) {
    %c0_i32 = arith.constant 0 : i32
    %c0_i32_0 = arith.constant 0 : i32
    %c0_i32_1 = arith.constant 0 : i32
    return %c0_i32, %c0_i32_0 : i32, i32
  }
  func.func @transform_4(%arg0: i32) -> (i32, i32) {
    %c0_i32 = arith.constant 0 : i32
    %c0_i32_0 = arith.constant 0 : i32
    %c0_i32_1 = arith.constant 0 : i32
    return %c0_i32, %c0_i32_0 : i32, i32
  }
  func.func @transform_5(%arg0: i32) -> (i32, i32) {
    %c0_i32 = arith.constant 0 : i32
    %c0_i32_0 = arith.constant 0 : i32
    %c0_i32_1 = arith.constant 0 : i32
    return %c0_i32, %c0_i32_0 : i32, i32
  }
  func.func @transform_6(%arg0: i32) -> (i32, i32) {
    %c0_i32 = arith.constant 0 : i32
    %c0_i32_0 = arith.constant 0 : i32
    %c0_i32_1 = arith.constant 0 : i32
    return %c0_i32, %c0_i32_0 : i32, i32
  }
  func.func @transform_7(%arg0: i32) -> (i32, i32) {
    %c0_i32 = arith.constant 0 : i32
    %c0_i32_0 = arith.constant 0 : i32
    %c0_i32_1 = arith.constant 0 : i32
    return %c0_i32, %c0_i32_0 : i32, i32
  }
  func.func @transform_8(%arg0: i32) -> (i32, i32) {
    %c0_i32 = arith.constant 0 : i32
    %c0_i32_0 = arith.constant 0 : i32
    %c0_i32_1 = arith.constant 0 : i32
    return %c0_i32, %c0_i32_0 : i32, i32
  }
  func.func @transform_9(%arg0: i32) -> (i32, i32) {
    %c0_i32 = arith.constant 0 : i32
    %c0_i32_0 = arith.constant 0 : i32
    %c0_i32_1 = arith.constant 0 : i32
    return %c0_i32, %c0_i32_0 : i32, i32
  }
  func.func @transform_10(%arg0: i32) -> (i32, i32) {
    %c0_i32 = arith.constant 0 : i32
    %c0_i32_0 = arith.constant 0 : i32
    %c0_i32_1 = arith.constant 0 : i32
    return %c0_i32, %c0_i32_0 : i32, i32
  }
  func.func @transform_11(%arg0: i32) -> (i32, i32) {
    %c0_i32 = arith.constant 0 : i32
    %c0_i32_0 = arith.constant 0 : i32
    return %arg0, %c0_i32 : i32, i32
  }
}

</mosaic_0001>

<llo_original>
// kernel: actor_critic_forward.1
$region0: #{actor_critic_forward.1}
  #allocation0 [shape = 'u32[]', space=smem, size = 0x4, offset = 0x4, fixed_abs, tag = 'smem constant byte address 0x4 - core index']
  #allocation1 [shape = 'u32[144,128]{1,0:T(1,128)}', space=vmem, size = 0x12000, scoped, tag = 'internal scratch']
  #allocation2 [shape = 'f32[1,1]{1,0:T(1,128)S(1)}', space=vmem, size = 0x200, scoped, tag = 'scoped memory for actor_critic_forward.1']
  %s0 = inlined_call_operand.vmem [shape: f32[16,64], index: 0, kind: input, shape index: {}]
  %s1 = inlined_call_operand.hbm [shape: f32[64,256], index: 1, kind: input, shape index: {}]
  %s2 = inlined_call_operand.vmem [shape: f32[1,256], index: 2, kind: input, shape index: {}]
  %s3 = inlined_call_operand.hbm [shape: f32[256,256], index: 3, kind: input, shape index: {}]
  %s4 = inlined_call_operand.vmem [shape: f32[1,256], index: 4, kind: input, shape index: {}]
  %s5 = inlined_call_operand.hbm [shape: f32[256,64], index: 5, kind: input, shape index: {}]
  %s6 = inlined_call_operand.vmem [shape: f32[1,64], index: 6, kind: input, shape index: {}]
  %s7 = inlined_call_operand.vmem [shape: f32[32,128], index: 7, kind: input, shape index: {}]
  %s8 = inlined_call_operand.vmem [shape: f32[1,128], index: 8, kind: input, shape index: {}]
  %s9 = inlined_call_operand.vmem [shape: f32[1,128], index: 9, kind: input, shape index: {}]
  %s10 = inlined_call_operand.<no memory space> [shape: f32[1,1], index: 10, kind: input, shape index: {}]
  %s11 = inlined_call_operand.vmem [shape: f32[16,128], index: 11, kind: output, shape index: {}]
  %s12 = sld [smem:[#allocation0]]
  $region66: #{actor_critic_forward.1} parent=0
    _
  %s14 = ssub.s32 1, %s12
  %s15 = scalar_select 0, %s14, %s12
  %v16 = vstv %s10
  %17 = vst [vmem:[#allocation2] sm:$0x1] %v16
  $region1: #{actor_critic_forward.1} parent=0
    #allocation3 [shape = 'u8[65536]{0}', space=vmem, size = 0x10000, scoped, tag = 'input window, operand 1, single buffered']
    #allocation4 [shape = 's32[1]{0}', space=sflag, size = 0x4, scoped, tag = 'scoped memory for actor_critic_forward.1']
    #allocation5 [shape = 'u8[262144]{0}', space=vmem, size = 0x40000, scoped, tag = 'input window, operand 3, single buffered']
    #allocation6 [shape = 's32[1]{0}', space=sflag, size = 0x4, scoped, tag = 'scoped memory for actor_critic_forward.1']
    #allocation7 [shape = 'u8[131072]{0}', space=vmem, size = 0x20000, scoped, tag = 'input window, operand 5, single buffered']
    %18 = vsyncpa [#allocation4], 0
    %19 = vsyncpa [#allocation6], 0
    // Predicated region
    $region2: #{actor_critic_forward.1} parent=1 // pred_check
      _
    $region3: #{actor_critic_forward.1} parent=1 // pred_check_branch
      %21 = sbr.rel (0) target = $region5
    $region4: #{actor_critic_forward.1} parent=1 // pred_region
      _
    $region5: #{actor_critic_forward.1} parent=1 // pred_fallthru
      _
    // Predicated region
    $region6: #{actor_critic_forward.1} parent=1 // pred_check
      _
    $region7: #{actor_critic_forward.1} parent=1 // pred_check_branch
      %23 = sbr.rel (0) target = $region9
    $region8: #{actor_critic_forward.1} parent=1 // pred_region
      %s25 = ssub.s32 2048, 2048
      %26 = vsyncadd [#allocation4], %s25
      %s27 = sshll.u32 [#allocation3], 4
      %s28 = int_to_ptr.vmem [resolvable:$true] %s27
      %33 = dma.hbm_to_vmem [thread:$0]  %s1, 2048, %s28, [#allocation4], 256, 256, 16
    $region9: #{actor_critic_forward.1} parent=1 // pred_fallthru
      _
    // Predicated region
    $region10: #{actor_critic_forward.1} parent=1 // pred_check
      _
    $region11: #{actor_critic_forward.1} parent=1 // pred_check_branch
      %35 = sbr.rel (0) target = $region13
    $region12: #{actor_critic_forward.1} parent=1 // pred_region
      _
    $region13: #{actor_critic_forward.1} parent=1 // pred_fallthru
      _
    // Predicated region
    $region14: #{actor_critic_forward.1} parent=1 // pred_check
      _
    $region15: #{actor_critic_forward.1} parent=1 // pred_check_branch
      %37 = sbr.rel (0) target = $region17
    $region16: #{actor_critic_forward.1} parent=1 // pred_region
      %s39 = ssub.s32 8192, 8192
      %40 = vsyncadd [#allocation6], %s39
      %s41 = sshll.u32 [#allocation5], 4
      %s42 = int_to_ptr.vmem [resolvable:$true] %s41
      %47 = dma.hbm_to_vmem [thread:$0]  %s3, 8192, %s42, [#allocation6], 256, 256, 16
    $region17: #{actor_critic_forward.1} parent=1 // pred_fallthru
      _
    // Predicated region
    $region18: #{actor_critic_forward.1} parent=1 // pred_check
      _
    $region19: #{actor_critic_forward.1} parent=1 // pred_check_branch
      %49 = sbr.rel (0) target = $region21
    $region20: #{actor_critic_forward.1} parent=1 // pred_region
      _
    $region21: #{actor_critic_forward.1} parent=1 // pred_fallthru
      _
    // Predicated region
    $region22: #{actor_critic_forward.1} parent=1 // pred_check
      _
    $region23: #{actor_critic_forward.1} parent=1 // pred_check_branch
      %51 = sbr.rel (0) target = $region25
    $region24: #{actor_critic_forward.1} parent=1 // pred_region
      %s53 = ssub.s32 4096, 4096
      %54 = vsyncadd [#allocation6], %s53
      %s55 = sshll.u32 [#allocation7], 4
      %s56 = int_to_ptr.vmem [resolvable:$true] %s55
      %61 = dma.hbm_to_vmem [thread:$0]  %s5, 4096, %s56, [#allocation6], 128, 128, 8
    $region25: #{actor_critic_forward.1} parent=1 // pred_fallthru
      _
    // Predicated region
    $region26: #{actor_critic_forward.1} parent=1 // pred_check
      _
    $region27: #{actor_critic_forward.1} parent=1 // pred_check_branch
      %63 = sbr.rel (0) target = $region29
    $region28: #{actor_critic_forward.1} parent=1 // pred_region
      _
    $region29: #{actor_critic_forward.1} parent=1 // pred_fallthru
      _
    // Predicated region
    $region30: #{actor_critic_forward.1} parent=1 // pred_check
      _
    $region31: #{actor_critic_forward.1} parent=1 // pred_check_branch
      %65 = sbr.rel (0) target = $region33
    $region32: #{actor_critic_forward.1} parent=1 // pred_region
      _
    $region33: #{actor_critic_forward.1} parent=1 // pred_fallthru
      _
    // Predicated region
    $region34: #{actor_critic_forward.1} parent=1 // pred_check
      _
    $region35: #{actor_critic_forward.1} parent=1 // pred_check_branch
      %67 = sbr.rel (0) target = $region37
    $region36: #{actor_critic_forward.1} parent=1 // pred_region
      _
    $region37: #{actor_critic_forward.1} parent=1 // pred_fallthru
      _
    // Predicated region
    $region38: #{actor_critic_forward.1} parent=1 // pred_check
      _
    $region39: #{actor_critic_forward.1} parent=1 // pred_check_branch
      %69 = sbr.rel (0) target = $region41
    $region40: #{actor_critic_forward.1} parent=1 // pred_region
      _
    $region41: #{actor_critic_forward.1} parent=1 // pred_fallthru
      _
    // Predicated region
    $region42: #{actor_critic_forward.1} parent=1 // pred_check
      _
    $region43: #{actor_critic_forward.1} parent=1 // pred_check_branch
      %71 = sbr.rel (0) target = $region45
    $region44: #{actor_critic_forward.1} parent=1 // pred_region
      _
    $region45: #{actor_critic_forward.1} parent=1 // pred_fallthru
      _
    // Predicated region
    $region46: #{actor_critic_forward.1} parent=1 // pred_check
      _
    $region47: #{actor_critic_forward.1} parent=1 // pred_check_branch
      %73 = sbr.rel (0) target = $region49
    $region48: #{actor_critic_forward.1} parent=1 // pred_region
      %74 = dma.done [#allocation4], 2048
    $region49: #{actor_critic_forward.1} parent=1 // pred_fallthru
      _
    // Predicated region
    $region50: #{actor_critic_forward.1} parent=1 // pred_check
      _
    $region51: #{actor_critic_forward.1} parent=1 // pred_check_branch
      %76 = sbr.rel (0) target = $region53
    $region52: #{actor_critic_forward.1} parent=1 // pred_region
      %77 = dma.done [#allocation6], 8192
    $region53: #{actor_critic_forward.1} parent=1 // pred_fallthru
      _
    // Predicated region
    $region54: #{actor_critic_forward.1} parent=1 // pred_check
      _
    $region55: #{actor_critic_forward.1} parent=1 // pred_check_branch
      %79 = sbr.rel (0) target = $region57
    $region56: #{actor_critic_forward.1} parent=1 // pred_region
      %80 = dma.done [#allocation6], 4096
    $region57: #{actor_critic_forward.1} parent=1 // pred_fallthru
      _
    %v81 = vld [vmem:[%s0] sm:$0xff]
    %v82 = vld [vmem:[%s0 + $0x8] sm:$0xff]
    %v83 = vld [vmem:[#allocation3] sm:$0xff]
    %v84 = vld [vmem:[#allocation3 + $0x8] sm:$0xff]
    %v85 = vld [vmem:[#allocation3 + $0x10] sm:$0xff]
    %v86 = vld [vmem:[#allocation3 + $0x18] sm:$0xff]
    %v87 = vld [vmem:[#allocation3 + $0x20] sm:$0xff]
    %v88 = vld [vmem:[#allocation3 + $0x28] sm:$0xff]
    %v89 = vld [vmem:[#allocation3 + $0x30] sm:$0xff]
    %v90 = vld [vmem:[#allocation3 + $0x38] sm:$0xff]
    %v91 = vld [vmem:[#allocation3 + $0x40] sm:$0xff]
    %v92 = vld [vmem:[#allocation3 + $0x48] sm:$0xff]
    %v93 = vld [vmem:[#allocation3 + $0x50] sm:$0xff]
    %v94 = vld [vmem:[#allocation3 + $0x58] sm:$0xff]
    %v95 = vld [vmem:[#allocation3 + $0x60] sm:$0xff]
    %v96 = vld [vmem:[#allocation3 + $0x68] sm:$0xff]
    %v97 = vld [vmem:[#allocation3 + $0x70] sm:$0xff]
    %v98 = vld [vmem:[#allocation3 + $0x78] sm:$0xff]
    %v99 = vld [vmem:[%s2] sm:$0x3]
    %v101 = vlaneseq
    %v102 = vshrl.u32 %v101, 7
    %v103 = vsub.s32 0, %v102
    %v104 = vrot.slane %v99, %v103
    %v105 = vlaneseq
    %v106 = vshrl.u32 %v105, 7
    %v107 = vsub.s32 1, %v106
    %v108 = vrot.slane %v99, %v107
    %vm111 = vcmask 523264
    %v113 = vsel %vm111, %v81, 0
    %v116 = vsel %vm111, %v82, 0
    %118 = vmatprep.subr.mxu0 %v84
    %119 = vmatpush1.msra.mxu0 %v83
    %120 = vmatprep.subr.mxu0 %v86
    %121 = vmatpush1.msra.mxu0 %v85
    %122 = vmatprep.subr.mxu0 %v88
    %123 = vmatpush1.msra.mxu0 %v87
    %124 = vmatprep.subr.mxu0 %v90
    %125 = vmatpush1.msra.mxu0 %v89
    %126 = vmatprep.subr.mxu0 %v92
    %127 = vmatpush1.msra.mxu0 %v91
    %128 = vmatprep.subr.mxu0 %v94
    %129 = vmatpush1.msra.mxu0 %v93
    %130 = vmatprep.subr.mxu0 %v96
    %131 = vmatpush1.msra.mxu0 %v95
    %132 = vmatprep.subr.mxu0 %v98
    %133 = vmatpush1.msra.mxu0 %v97
    %134 = vmatprep.subr.mxu0 0.0
    %135 = vmatpush1.msra.mxu0 0.0
    %136 = vmatprep.subr.mxu0 0.0
    %137 = vmatpush1.msra.mxu0 0.0
    %138 = vmatprep.subr.mxu0 0.0
    %139 = vmatpush1.msra.mxu0 0.0
    %140 = vmatprep.subr.mxu0 0.0
    %141 = vmatpush1.msra.mxu0 0.0
    %142 = vmatprep.subr.mxu0 0.0
    %143 = vmatpush1.msra.mxu0 0.0
    %144 = vmatprep.subr.mxu0 0.0
    %145 = vmatpush1.msra.mxu0 0.0
    %146 = vmatprep.subr.mxu0 0.0
    %147 = vmatpush1.msra.mxu0 0.0
    %148 = vmatprep.subr.mxu0 0.0
    %149 = vmatpush1.msra.mxu0 0.0
    %150 = vmatprep.subr.mxu0 0.0
    %151 = vmatpush1.msra.mxu0 0.0
    %152 = vmatprep.subr.mxu0 0.0
    %153 = vmatpush1.msra.mxu0 0.0
    %154 = vmatprep.subr.mxu0 0.0
    %155 = vmatpush1.msra.mxu0 0.0
    %156 = vmatprep.subr.mxu0 0.0
    %157 = vmatpush1.msra.mxu0 0.0
    %158 = vmatprep.subr.mxu0 0.0
    %159 = vmatpush1.msra.mxu0 0.0
    %160 = vmatprep.subr.mxu0 0.0
    %161 = vmatpush1.msra.mxu0 0.0
    %162 = vmatprep.subr.mxu0 0.0
    %163 = vmatpush1.msra.mxu0 0.0
    %164 = vmatprep.subr.mxu0 0.0
    %165 = vmatpush1.msra.mxu0 0.0
    %166 = vmatprep.subr.mxu0 0.0
    %167 = vmatpush1.msra.mxu0 0.0
    %168 = vmatprep.subr.mxu0 0.0
    %169 = vmatpush1.msra.mxu0 0.0
    %170 = vmatprep.subr.mxu0 0.0
    %171 = vmatpush1.msra.mxu0 0.0
    %172 = vmatprep.subr.mxu0 0.0
    %173 = vmatpush1.msra.mxu0 0.0
    %174 = vmatprep.subr.mxu0 0.0
    %175 = vmatpush1.msra.mxu0 0.0
    %176 = vmatprep.subr.mxu0 0.0
    %177 = vmatpush1.msra.mxu0 0.0
    %178 = vmatprep.subr.mxu0 0.0
    %179 = vmatpush1.msra.mxu0 0.0
    %180 = vmatprep.subr.mxu0 0.0
    %181 = vmatpush1.msra.mxu0 0.0
    %182 = vmatprep.mubr.f32.mxu0 0.0
    %183 = vmatmul.mubr.f32.gmra.mrb[0].mxu0 %v113
    %v184 = vpop.f32.mrb[0].mxu0
    %v185 = vadd.f32 %v104, %v184
    %v186 = vpop.f32.mrb[0].mxu0
    %v187 = vadd.f32 %v108, %v186
    %188 = vmatprep.mubr.f32.mxu0 0.0
    %189 = vmatmul.mubr.f32.gmra.mrb[0].mxu0 %v116
    %v190 = vpop.f32.mrb[0].mxu0
    %v191 = vadd.f32 %v104, %v190
    %v192 = vpop.f32.mrb[0].mxu0
    %v193 = vadd.f32 %v108, %v192
    %194 = vdwg.mxu0
    %v195 = vmax.f32 %v185, 0.0
    %v196 = vmax.f32 %v187, 0.0
    %v197 = vmax.f32 %v191, 0.0
    %v198 = vmax.f32 %v193, 0.0
    %v199 = vld [vmem:[#allocation5] sm:$0xff]
    %v200 = vld [vmem:[#allocation5 + $0x8] sm:$0xff]
    %v201 = vld [vmem:[#allocation5 + $0x10] sm:$0xff]
    %v202 = vld [vmem:[#allocation5 + $0x18] sm:$0xff]
    %v203 = vld [vmem:[#allocation5 + $0x20] sm:$0xff]
    %v204 = vld [vmem:[#allocation5 + $0x28] sm:$0xff]
    %v205 = vld [vmem:[#allocation5 + $0x30] sm:$0xff]
    %v206 = vld [vmem:[#allocation5 + $0x38] sm:$0xff]
    %v207 = vld [vmem:[#allocation5 + $0x40] sm:$0xff]
    %v208 = vld [vmem:[#allocation5 + $0x48] sm:$0xff]
    %v209 = vld [vmem:[#allocation5 + $0x50] sm:$0xff]
    %v210 = vld [vmem:[#allocation5 + $0x58] sm:$0xff]
    %v211 = vld [vmem:[#allocation5 + $0x60] sm:$0xff]
    %v212 = vld [vmem:[#allocation5 + $0x68] sm:$0xff]
    %v213 = vld [vmem:[#allocation5 + $0x70] sm:$0xff]
    %v214 = vld [vmem:[#allocation5 + $0x78] sm:$0xff]
    %v215 = vld [vmem:[#allocation5 + $0x80] sm:$0xff]
    %v216 = vld [vmem:[#allocation5 + $0x88] sm:$0xff]
    %v217 = vld [vmem:[#allocation5 + $0x90] sm:$0xff]
    %v218 = vld [vmem:[#allocation5 + $0x98] sm:$0xff]
    %v219 = vld [vmem:[#allocation5 + $0xa0] sm:$0xff]
    %v220 = vld [vmem:[#allocation5 + $0xa8] sm:$0xff]
    %v221 = vld [vmem:[#allocation5 + $0xb0] sm:$0xff]
    %v222 = vld [vmem:[#allocation5 + $0xb8] sm:$0xff]
    %v223 = vld [vmem:[#allocation5 + $0xc0] sm:$0xff]
    %v224 = vld [vmem:[#allocation5 + $0xc8] sm:$0xff]
    %v225 = vld [vmem:[#allocation5 + $0xd0] sm:$0xff]
    %v226 = vld [vmem:[#allocation5 + $0xd8] sm:$0xff]
    %v227 = vld [vmem:[#allocation5 + $0xe0] sm:$0xff]
    %v228 = vld [vmem:[#allocation5 + $0xe8] sm:$0xff]
    %v229 = vld [vmem:[#allocation5 + $0xf0] sm:$0xff]
    %v230 = vld [vmem:[#allocation5 + $0xf8] sm:$0xff]
    %v231 = vld [vmem:[#allocation5 + $0x100] sm:$0xff]
    %v232 = vld [vmem:[#allocation5 + $0x108] sm:$0xff]
    %v233 = vld [vmem:[#allocation5 + $0x110] sm:$0xff]
    %v234 = vld [vmem:[#allocation5 + $0x118] sm:$0xff]
    %v235 = vld [vmem:[#allocation5 + $0x120] sm:$0xff]
    %v236 = vld [vmem:[#allocation5 + $0x128] sm:$0xff]
    %v237 = vld [vmem:[#allocation5 + $0x130] sm:$0xff]
    %v238 = vld [vmem:[#allocation5 + $0x138] sm:$0xff]
    %v239 = vld [vmem:[#allocation5 + $0x140] sm:$0xff]
    %v240 = vld [vmem:[#allocation5 + $0x148] sm:$0xff]
    %v241 = vld [vmem:[#allocation5 + $0x150] sm:$0xff]
    %v242 = vld [vmem:[#allocation5 + $0x158] sm:$0xff]
    %v243 = vld [vmem:[#allocation5 + $0x160] sm:$0xff]
    %v244 = vld [vmem:[#allocation5 + $0x168] sm:$0xff]
    %v245 = vld [vmem:[#allocation5 + $0x170] sm:$0xff]
    %v246 = vld [vmem:[#allocation5 + $0x178] sm:$0xff]
    %v247 = vld [vmem:[#allocation5 + $0x180] sm:$0xff]
    %v248 = vld [vmem:[#allocation5 + $0x188] sm:$0xff]
    %v249 = vld [vmem:[#allocation5 + $0x190] sm:$0xff]
    %v250 = vld [vmem:[#allocation5 + $0x198] sm:$0xff]
    %v251 = vld [vmem:[#allocation5 + $0x1a0] sm:$0xff]
    %v252 = vld [vmem:[#allocation5 + $0x1a8] sm:$0xff]
    %v253 = vld [vmem:[#allocation5 + $0x1b0] sm:$0xff]
    %v254 = vld [vmem:[#allocation5 + $0x1b8] sm:$0xff]
    %v255 = vld [vmem:[#allocation5 + $0x1c0] sm:$0xff]
    %v256 = vld [vmem:[#allocation5 + $0x1c8] sm:$0xff]
    %v257 = vld [vmem:[#allocation5 + $0x1d0] sm:$0xff]
    %v258 = vld [vmem:[#allocation5 + $0x1d8] sm:$0xff]
    %v259 = vld [vmem:[#allocation5 + $0x1e0] sm:$0xff]
    %v260 = vld [vmem:[#allocation5 + $0x1e8] sm:$0xff]
    %v261 = vld [vmem:[#allocation5 + $0x1f0] sm:$0xff]
    %v262 = vld [vmem:[#allocation5 + $0x1f8] sm:$0xff]
    %v263 = vld [vmem:[%s4] sm:$0x3]
    %v265 = vlaneseq
    %v266 = vshrl.u32 %v265, 7
    %v267 = vsub.s32 0, %v266
    %v268 = vrot.slane %v263, %v267
    %v269 = vlaneseq
    %v270 = vshrl.u32 %v269, 7
    %v271 = vsub.s32 1, %v270
    %v272 = vrot.slane %v263, %v271
    %275 = vmatprep.subr.mxu0 %v200
    %276 = vmatpush1.msra.mxu0 %v199
    %277 = vmatprep.subr.mxu0 %v202
    %278 = vmatpush1.msra.mxu0 %v201
    %279 = vmatprep.subr.mxu0 %v204
    %280 = vmatpush1.msra.mxu0 %v203
    %281 = vmatprep.subr.mxu0 %v206
    %282 = vmatpush1.msra.mxu0 %v205
    %283 = vmatprep.subr.mxu0 %v208
    %284 = vmatpush1.msra.mxu0 %v207
    %285 = vmatprep.subr.mxu0 %v210
    %286 = vmatpush1.msra.mxu0 %v209
    %287 = vmatprep.subr.mxu0 %v212
    %288 = vmatpush1.msra.mxu0 %v211
    %289 = vmatprep.subr.mxu0 %v214
    %290 = vmatpush1.msra.mxu0 %v213
    %291 = vmatprep.subr.mxu0 %v216
    %292 = vmatpush1.msra.mxu0 %v215
    %293 = vmatprep.subr.mxu0 %v218
    %294 = vmatpush1.msra.mxu0 %v217
    %295 = vmatprep.subr.mxu0 %v220
    %296 = vmatpush1.msra.mxu0 %v219
    %297 = vmatprep.subr.mxu0 %v222
    %298 = vmatpush1.msra.mxu0 %v221
    %299 = vmatprep.subr.mxu0 %v224
    %300 = vmatpush1.msra.mxu0 %v223
    %301 = vmatprep.subr.mxu0 %v226
    %302 = vmatpush1.msra.mxu0 %v225
    %303 = vmatprep.subr.mxu0 %v228
    %304 = vmatpush1.msra.mxu0 %v227
    %305 = vmatprep.subr.mxu0 %v230
    %306 = vmatpush1.msra.mxu0 %v229
    %307 = vmatprep.subr.mxu0 %v232
    %308 = vmatpush1.msra.mxu0 %v231
    %309 = vmatprep.subr.mxu0 %v234
    %310 = vmatpush1.msra.mxu0 %v233
    %311 = vmatprep.subr.mxu0 %v236
    %312 = vmatpush1.msra.mxu0 %v235
    %313 = vmatprep.subr.mxu0 %v238
    %314 = vmatpush1.msra.mxu0 %v237
    %315 = vmatprep.subr.mxu0 %v240
    %316 = vmatpush1.msra.mxu0 %v239
    %317 = vmatprep.subr.mxu0 %v242
    %318 = vmatpush1.msra.mxu0 %v241
    %319 = vmatprep.subr.mxu0 %v244
    %320 = vmatpush1.msra.mxu0 %v243
    %321 = vmatprep.subr.mxu0 %v246
    %322 = vmatpush1.msra.mxu0 %v245
    %323 = vmatprep.subr.mxu0 %v248
    %324 = vmatpush1.msra.mxu0 %v247
    %325 = vmatprep.subr.mxu0 %v250
    %326 = vmatpush1.msra.mxu0 %v249
    %327 = vmatprep.subr.mxu0 %v252
    %328 = vmatpush1.msra.mxu0 %v251
    %329 = vmatprep.subr.mxu0 %v254
    %330 = vmatpush1.msra.mxu0 %v253
    %331 = vmatprep.subr.mxu0 %v256
    %332 = vmatpush1.msra.mxu0 %v255
    %333 = vmatprep.subr.mxu0 %v258
    %334 = vmatpush1.msra.mxu0 %v257
    %335 = vmatprep.subr.mxu0 %v260
    %336 = vmatpush1.msra.mxu0 %v259
    %337 = vmatprep.subr.mxu0 %v262
    %338 = vmatpush1.msra.mxu0 %v261
    %339 = vmatprep.mubr.f32.mxu0 %v196
    %340 = vmatmul.mubr.f32.gmra.mrb[0].mxu0 %v195
    %v341 = vpop.f32.mrb[0].mxu0
    %v342 = vadd.f32 %v268, %v341
    %v343 = vpop.f32.mrb[0].mxu0
    %v344 = vadd.f32 %v272, %v343
    %345 = vmatprep.mubr.f32.mxu0 %v198
    %346 = vmatmul.mubr.f32.gmra.mrb[0].mxu0 %v197
    %v347 = vpop.f32.mrb[0].mxu0
    %v348 = vadd.f32 %v268, %v347
    %v349 = vpop.f32.mrb[0].mxu0
    %v350 = vadd.f32 %v272, %v349
    %351 = vdwg.mxu0
    %v352 = vmax.f32 %v342, 0.0
    %v353 = vmax.f32 %v344, 0.0
    %v354 = vmax.f32 %v348, 0.0
    %v355 = vmax.f32 %v350, 0.0
    %v356 = vld [vmem:[#allocation7] sm:$0xff]
    %v357 = vld [vmem:[#allocation7 + $0x8] sm:$0xff]
    %v358 = vld [vmem:[#allocation7 + $0x10] sm:$0xff]
    %v359 = vld [vmem:[#allocation7 + $0x18] sm:$0xff]
    %v360 = vld [vmem:[#allocation7 + $0x20] sm:$0xff]
    %v361 = vld [vmem:[#allocation7 + $0x28] sm:$0xff]
    %v362 = vld [vmem:[#allocation7 + $0x30] sm:$0xff]
    %v363 = vld [vmem:[#allocation7 + $0x38] sm:$0xff]
    %v364 = vld [vmem:[#allocation7 + $0x40] sm:$0xff]
    %v365 = vld [vmem:[#allocation7 + $0x48] sm:$0xff]
    %v366 = vld [vmem:[#allocation7 + $0x50] sm:$0xff]
    %v367 = vld [vmem:[#allocation7 + $0x58] sm:$0xff]
    %v368 = vld [vmem:[#allocation7 + $0x60] sm:$0xff]
    %v369 = vld [vmem:[#allocation7 + $0x68] sm:$0xff]
    %v370 = vld [vmem:[#allocation7 + $0x70] sm:$0xff]
    %v371 = vld [vmem:[#allocation7 + $0x78] sm:$0xff]
    %v372 = vld [vmem:[#allocation7 + $0x80] sm:$0xff]
    %v373 = vld [vmem:[#allocation7 + $0x88] sm:$0xff]
    %v374 = vld [vmem:[#allocation7 + $0x90] sm:$0xff]
    %v375 = vld [vmem:[#allocation7 + $0x98] sm:$0xff]
    %v376 = vld [vmem:[#allocation7 + $0xa0] sm:$0xff]
    %v377 = vld [vmem:[#allocation7 + $0xa8] sm:$0xff]
    %v378 = vld [vmem:[#allocation7 + $0xb0] sm:$0xff]
    %v379 = vld [vmem:[#allocation7 + $0xb8] sm:$0xff]
    %v380 = vld [vmem:[#allocation7 + $0xc0] sm:$0xff]
    %v381 = vld [vmem:[#allocation7 + $0xc8] sm:$0xff]
    %v382 = vld [vmem:[#allocation7 + $0xd0] sm:$0xff]
    %v383 = vld [vmem:[#allocation7 + $0xd8] sm:$0xff]
    %v384 = vld [vmem:[#allocation7 + $0xe0] sm:$0xff]
    %v385 = vld [vmem:[#allocation7 + $0xe8] sm:$0xff]
    %v386 = vld [vmem:[#allocation7 + $0xf0] sm:$0xff]
    %v387 = vld [vmem:[#allocation7 + $0xf8] sm:$0xff]
    %v388 = vld [vmem:[%s6] sm:$0x1]
    %v390 = vlaneseq
    %v391 = vshrl.u32 %v390, 7
    %v392 = vsub.s32 0, %v391
    %v393 = vrot.slane %v388, %v392
    %395 = vmatprep.subr.mxu0 0.0
    %396 = vmatpush1.msra.mxu0 %v356
    %397 = vmatprep.subr.mxu0 0.0
    %398 = vmatpush1.msra.mxu0 %v357
    %399 = vmatprep.subr.mxu0 0.0
    %400 = vmatpush1.msra.mxu0 %v358
    %401 = vmatprep.subr.mxu0 0.0
    %402 = vmatpush1.msra.mxu0 %v359
    %403 = vmatprep.subr.mxu0 0.0
    %404 = vmatpush1.msra.mxu0 %v360
    %405 = vmatprep.subr.mxu0 0.0
    %406 = vmatpush1.msra.mxu0 %v361
    %407 = vmatprep.subr.mxu0 0.0
    %408 = vmatpush1.msra.mxu0 %v362
    %409 = vmatprep.subr.mxu0 0.0
    %410 = vmatpush1.msra.mxu0 %v363
    %411 = vmatprep.subr.mxu0 0.0
    %412 = vmatpush1.msra.mxu0 %v364
    %413 = vmatprep.subr.mxu0 0.0
    %414 = vmatpush1.msra.mxu0 %v365
    %415 = vmatprep.subr.mxu0 0.0
    %416 = vmatpush1.msra.mxu0 %v366
    %417 = vmatprep.subr.mxu0 0.0
    %418 = vmatpush1.msra.mxu0 %v367
    %419 = vmatprep.subr.mxu0 0.0
    %420 = vmatpush1.msra.mxu0 %v368
    %421 = vmatprep.subr.mxu0 0.0
    %422 = vmatpush1.msra.mxu0 %v369
    %423 = vmatprep.subr.mxu0 0.0
    %424 = vmatpush1.msra.mxu0 %v370
    %425 = vmatprep.subr.mxu0 0.0
    %426 = vmatpush1.msra.mxu0 %v371
    %427 = vmatprep.subr.mxu0 0.0
    %428 = vmatpush1.msra.mxu0 %v372
    %429 = vmatprep.subr.mxu0 0.0
    %430 = vmatpush1.msra.mxu0 %v373
    %431 = vmatprep.subr.mxu0 0.0
    %432 = vmatpush1.msra.mxu0 %v374
    %433 = vmatprep.subr.mxu0 0.0
    %434 = vmatpush1.msra.mxu0 %v375
    %435 = vmatprep.subr.mxu0 0.0
    %436 = vmatpush1.msra.mxu0 %v376
    %437 = vmatprep.subr.mxu0 0.0
    %438 = vmatpush1.msra.mxu0 %v377
    %439 = vmatprep.subr.mxu0 0.0
    %440 = vmatpush1.msra.mxu0 %v378
    %441 = vmatprep.subr.mxu0 0.0
    %442 = vmatpush1.msra.mxu0 %v379
    %443 = vmatprep.subr.mxu0 0.0
    %444 = vmatpush1.msra.mxu0 %v380
    %445 = vmatprep.subr.mxu0 0.0
    %446 = vmatpush1.msra.mxu0 %v381
    %447 = vmatprep.subr.mxu0 0.0
    %448 = vmatpush1.msra.mxu0 %v382
    %449 = vmatprep.subr.mxu0 0.0
    %450 = vmatpush1.msra.mxu0 %v383
    %451 = vmatprep.subr.mxu0 0.0
    %452 = vmatpush1.msra.mxu0 %v384
    %453 = vmatprep.subr.mxu0 0.0
    %454 = vmatpush1.msra.mxu0 %v385
    %455 = vmatprep.subr.mxu0 0.0
    %456 = vmatpush1.msra.mxu0 %v386
    %457 = vmatprep.subr.mxu0 0.0
    %458 = vmatpush1.msra.mxu0 %v387
    %459 = vmatprep.mubr.f32.mxu0 %v353
    %460 = vmatmul.mubr.f32.gmra.mrb[0].mxu0 %v352
    %v461 = vpop.f32.mrb[0].mxu0
    %v462 = vadd.f32 %v393, %v461
    %v463 = vpop.f32.mrb[0].mxu0
    %464 = vmatprep.mubr.f32.mxu0 %v355
    %465 = vmatmul.mubr.f32.gmra.mrb[0].mxu0 %v354
    %v466 = vpop.f32.mrb[0].mxu0
    %v467 = vadd.f32 %v393, %v466
    %v468 = vpop.f32.mrb[0].mxu0
    %469 = vdwg.mxu0
    %472 = vrot.lane.b32.xlu0 %v462, 96
    %v473 = vpop.permute.xlu0 %472
    %474 = vrot.lane.b32.xlu0 %v467, 96
    %v475 = vpop.permute.xlu0 %474
    %v478 = vadd.f32 %v462, %v473
    %v479 = vadd.f32 %v467, %v475
    %v480 = vld [vmem:[%s7] sm:$0xff]
    %v481 = vld [vmem:[%s7 + $0x8] sm:$0xff]
    %v482 = vld [vmem:[%s7 + $0x10] sm:$0xff]
    %v483 = vld [vmem:[%s7 + $0x18] sm:$0xff]
    %v484 = vld [vmem:[%s8] sm:$0x1]
    %v486 = vlaneseq
    %v487 = vshrl.u32 %v486, 7
    %v488 = vsub.s32 0, %v487
    %v489 = vrot.slane %v484, %v488
    %vm491 = vcmask 261120
    %v493 = vsel %vm491, %v478, 0
    %v496 = vsel %vm491, %v479, 0
    %498 = vmatprep.subr.mxu0 0.0
    %499 = vmatpush1.msra.mxu0 %v480
    %500 = vmatprep.subr.mxu0 0.0
    %501 = vmatpush1.msra.mxu0 %v481
    %502 = vmatprep.subr.mxu0 0.0
    %503 = vmatpush1.msra.mxu0 %v482
    %504 = vmatprep.subr.mxu0 0.0
    %505 = vmatpush1.msra.mxu0 %v483
    %506 = vmatprep.subr.mxu0 0.0
    %507 = vmatpush1.msra.mxu0 0.0
    %508 = vmatprep.subr.mxu0 0.0
    %509 = vmatpush1.msra.mxu0 0.0
    %510 = vmatprep.subr.mxu0 0.0
    %511 = vmatpush1.msra.mxu0 0.0
    %512 = vmatprep.subr.mxu0 0.0
    %513 = vmatpush1.msra.mxu0 0.0
    %514 = vmatprep.subr.mxu0 0.0
    %515 = vmatpush1.msra.mxu0 0.0
    %516 = vmatprep.subr.mxu0 0.0
    %517 = vmatpush1.msra.mxu0 0.0
    %518 = vmatprep.subr.mxu0 0.0
    %519 = vmatpush1.msra.mxu0 0.0
    %520 = vmatprep.subr.mxu0 0.0
    %521 = vmatpush1.msra.mxu0 0.0
    %522 = vmatprep.subr.mxu0 0.0
    %523 = vmatpush1.msra.mxu0 0.0
    %524 = vmatprep.subr.mxu0 0.0
    %525 = vmatpush1.msra.mxu0 0.0
    %526 = vmatprep.subr.mxu0 0.0
    %527 = vmatpush1.msra.mxu0 0.0
    %528 = vmatprep.subr.mxu0 0.0
    %529 = vmatpush1.msra.mxu0 0.0
    %530 = vmatprep.subr.mxu0 0.0
    %531 = vmatpush1.msra.mxu0 0.0
    %532 = vmatprep.subr.mxu0 0.0
    %533 = vmatpush1.msra.mxu0 0.0
    %534 = vmatprep.subr.mxu0 0.0
    %535 = vmatpush1.msra.mxu0 0.0
    %536 = vmatprep.subr.mxu0 0.0
    %537 = vmatpush1.msra.mxu0 0.0
    %538 = vmatprep.subr.mxu0 0.0
    %539 = vmatpush1.msra.mxu0 0.0
    %540 = vmatprep.subr.mxu0 0.0
    %541 = vmatpush1.msra.mxu0 0.0
    %542 = vmatprep.subr.mxu0 0.0
    %543 = vmatpush1.msra.mxu0 0.0
    %544 = vmatprep.subr.mxu0 0.0
    %545 = vmatpush1.msra.mxu0 0.0
    %546 = vmatprep.subr.mxu0 0.0
    %547 = vmatpush1.msra.mxu0 0.0
    %548 = vmatprep.subr.mxu0 0.0
    %549 = vmatpush1.msra.mxu0 0.0
    %550 = vmatprep.subr.mxu0 0.0
    %551 = vmatpush1.msra.mxu0 0.0
    %552 = vmatprep.subr.mxu0 0.0
    %553 = vmatpush1.msra.mxu0 0.0
    %554 = vmatprep.subr.mxu0 0.0
    %555 = vmatpush1.msra.mxu0 0.0
    %556 = vmatprep.subr.mxu0 0.0
    %557 = vmatpush1.msra.mxu0 0.0
    %558 = vmatprep.subr.mxu0 0.0
    %559 = vmatpush1.msra.mxu0 0.0
    %560 = vmatprep.subr.mxu0 0.0
    %561 = vmatpush1.msra.mxu0 0.0
    %562 = vmatprep.mubr.f32.mxu0 0.0
    %563 = vmatmul.mubr.f32.gmra.mrb[0].mxu0 %v493
    %v564 = vpop.f32.mrb[0].mxu0
    %v565 = vadd.f32 %v489, %v564
    %v566 = vpop.f32.mrb[0].mxu0
    %567 = vmatprep.mubr.f32.mxu0 0.0
    %568 = vmatmul.mubr.f32.gmra.mrb[0].mxu0 %v496
    %v569 = vpop.f32.mrb[0].mxu0
    %v570 = vadd.f32 %v489, %v569
    %v571 = vpop.f32.mrb[0].mxu0
    %572 = vdwg.mxu0
    %v573 = vmax.f32 %v565, 0.0
    %v574 = vmax.f32 %v570, 0.0
    %v575 = vld [vmem:[%s9] sm:$0x1]
    %v577 = vlaneseq
    %v578 = vshrl.u32 %v577, 7
    %v579 = vsub.s32 0, %v578
    %v580 = vrot.slane %v575, %v579
    %v582 = vmul.f32 %v573, %v580
    %v583 = vmul.f32 %v574, %v580
    %584 = vadd.xlane.f32.xlu0 %v582
    %v585 = vpop.xlane.xlu0 %584
    %586 = vadd.xlane.f32.xlu0 %v583
    %v587 = vpop.xlane.xlu0 %586
    %v588 = vld [vmem:[#allocation2] sm:$0x1]
    %v590 = vlaneseq
    %v591 = vshrl.u32 %v590, 7
    %v592 = vsub.s32 0, %v591
    %v593 = vrot.slane %v588, %v592
    %v595 = vadd.f32 %v585, %v593
    %v596 = vadd.f32 %v587, %v593
    %598 = vset.pattern.permute.xlu0 0
    %599 = vperm.xlu0 %598, %v595
    %v600 = vpop.permute.xlu0 %599
    %603 = vset.pattern.permute.xlu0 0
    %604 = vperm.xlu0 %603, %v596
    %v605 = vpop.permute.xlu0 %604
    %v607 = vsel %vm491, %v478, %v462
    %v608 = vsel %vm491, %v479, %v467
    %v609 = vsel %vm111, %v607, %v600
    %v610 = vsel %vm111, %v608, %v605
    %611 = vst [vmem:[%s11] sm:$0xff] %v609
    %612 = vst [vmem:[%s11 + $0x8] sm:$0xff] %v610
    // Predicated region
    $region58: #{actor_critic_forward.1} parent=1 // pred_check
      _
    $region59: #{actor_critic_forward.1} parent=1 // pred_check_branch
      %614 = sbr.rel (0) target = $region61
    $region60: #{actor_critic_forward.1} parent=1 // pred_region
      _
    $region61: #{actor_critic_forward.1} parent=1 // pred_fallthru
      _
    // Predicated region
    $region62: #{actor_critic_forward.1} parent=1 // pred_check
      _
    $region63: #{actor_critic_forward.1} parent=1 // pred_check_branch
      %616 = sbr.rel (0) target = $region65
    $region64: #{actor_critic_forward.1} parent=1 // pred_region
      _
    $region65: #{actor_critic_forward.1} parent=1 // pred_fallthru
      _
    %617 = vsyncpa [#allocation4], 1
    %618 = vsyncpa [#allocation6], 1

</llo_original>
